<compile_context>
chip_gen: v5e
topology: v5e:2x2
jax: 0.10.0
libtpu: 0.0.40
codegen_flags: <defaults>
</compile_context>

<pallas_src>
import functools

import jax
import jax.numpy as jnp
import numpy as np
from jax.experimental import pallas as pl
from jax.experimental.pallas import tpu as pltpu


# --------------------------------------------------------------------------
# Fused Pallas kernel
# --------------------------------------------------------------------------
def make_pinn_loss_kernel(n_u, n_f, n_hidden, hidden_w, nu, inv_n_u, inv_n_f):
    """Build the fused loss kernel.

    refs: points slab (N_u+N_f, 128), parameter slab (P, H), out (8,128) VMEM,
          scratch (N_u + 4*N_f, H) VMEM (persistent row-stacked streams).
    Stream row layout of the scratch buffer:
      [0, n_uv)          value streams (u-branch rows then f-branch rows)
      [n_uv, +N_f)       d/dx stream
      [+N_f, +2N_f)      d/dt stream
      [+2N_f, +3N_f)     d2/dx2 stream
    """
    H = hidden_w
    n_uv = n_u + n_f                 # rows of the two "value" streams
    r_zx = n_uv
    r_zt = n_uv + n_f
    r_zxx = n_uv + 2 * n_f
    n_tot = n_uv + 3 * n_f           # = n_u + 4*n_f

    def kernel(pts_ref, prm_ref, out_ref, stk_ref):
        pts = pts_ref[...]                           # (n_uv, 128) lane-dense point slab
        prm = prm_ref[...]                           # (P, H) parameter slab

        # ---- static unpack of the parameter slab (all offsets multiples of 8) ----
        w0_x = prm[0:1, :]                           # d(layer-0 pre-act)/dx
        w0_t = prm[1:2, :]                           # d(layer-0 pre-act)/dt
        b0 = prm[2:3, :]
        off = 8
        hidden = []
        for _ in range(n_hidden - 1):
            hidden.append((prm[off:off + H, :],               # Wi^T (H, H)
                           prm[off + H:off + H + 1, :]))      # bi   (1, H)
            off += H + 8
        wl_row = prm[off:off + 1, :]                 # bias-free head weight as a (1, H) row

        x_col = pts[:, 0:1]                          # [x_u ; x_f]  (n_uv, 1)
        t_col = pts[:, 1:2]                          # [t_u ; t_f]
        u_tgt = pts[0:n_u, 2:3]                      # training targets

        # ---- layer 0, fully specialized (2-feature input => broadcasts, no MXU) ----
        s_all = jnp.tanh(x_col * w0_x + t_col * w0_t + b0)        # (n_uv, H) both value streams
        s = s_all[n_u:, :]                                        # f-branch value only
        sp = 1.0 - s * s                                          # tanh'
        spp = -2.0 * s * sp                                       # tanh''
        stk_ref[0:n_uv, :] = s_all
        stk_ref[r_zx:r_zt, :] = sp * w0_x                         # a_x  = W0_x row
        stk_ref[r_zt:r_zxx, :] = sp * w0_t                        # a_t  = W0_t row
        stk_ref[r_zxx:n_tot, :] = spp * (w0_x * w0_x)             # a_xx = 0

        # ---- hidden layers: one row-stacked MXU call for all 5 streams ----
        for wt, b in hidden:
            r = jnp.dot(stk_ref[...], wt, preferred_element_type=jnp.float32)
            s_all = jnp.tanh(r[0:n_uv, :] + b)                    # bias on value rows only
            s = s_all[n_u:, :]
            sp = 1.0 - s * s
            spp = -2.0 * s * sp
            ax = r[r_zx:r_zt, :]
            at = r[r_zt:r_zxx, :]
            axx = r[r_zxx:n_tot, :]
            stk_ref[0:n_uv, :] = s_all
            stk_ref[r_zx:r_zt, :] = sp * ax
            stk_ref[r_zt:r_zxx, :] = sp * at
            stk_ref[r_zxx:n_tot, :] = spp * ax * ax + sp * axx

        # ---- bias-free head for all 5 streams: lane reduce against the WL row ----
        r = jnp.sum(stk_ref[...] * wl_row, axis=-1, keepdims=True)   # (n_tot, 1)
        u_pred = r[0:n_u, :]
        u = r[n_u:n_uv, :]
        u_x = r[r_zx:r_zt, :]
        u_t = r[r_zt:r_zxx, :]
        u_xx = r[r_zxx:n_tot, :]

        f = u_t + u * u_x - nu * u_xx
        err = u_tgt - u_pred
        sse_u = jnp.sum(err * err, keepdims=True)                    # (1, 1)
        sse_f = jnp.sum(f * f, keepdims=True)                        # (1, 1)
        loss = sse_u * inv_n_u + sse_f * inv_n_f

        # lane-dense (8,128) full-tile unmasked store; wrapper reads [0, 0]
        out_ref[...] = jnp.broadcast_to(loss, out_ref.shape)

    return kernel


# --------------------------------------------------------------------------
# Setup-time packing (done ONCE; training points / weight layout never change)
# --------------------------------------------------------------------------
def pack_points(x_u, t_u, u_tgt, x_f, t_f):
    """Pack the five (N,1) point columns into one lane-dense (N_u+N_f, 128) slab."""
    n_u = x_u.shape[0]
    n_f = x_f.shape[0]
    slab = jnp.zeros((n_u + n_f, 128), jnp.float32)
    slab = slab.at[:n_u, 0:1].set(x_u)
    slab = slab.at[:n_u, 1:2].set(t_u)
    slab = slab.at[:n_u, 2:3].set(u_tgt)
    slab = slab.at[n_u:, 0:1].set(x_f)
    slab = slab.at[n_u:, 1:2].set(t_f)
    return slab


def pack_params(params_flat, layers):
    """Pack [W0^T, b0, (Wi^T, bi)..., WL^T] into one (P, H) slab; every block starts at
    an 8-row-aligned offset so in-kernel static slices stay tile-aligned."""
    n_hidden = len(layers) - 2
    H = layers[1]
    assert all(h == H for h in layers[1:-1]), "uniform hidden width expected"
    assert H % 8 == 0 and layers[-1] == 1
    blocks = []
    blk0 = jnp.zeros((8, H), jnp.float32)
    blk0 = blk0.at[0:2, :].set(params_flat[0]).at[2:3, :].set(params_flat[1])
    blocks.append(blk0)
    idx = 2
    for _ in range(n_hidden - 1):
        blocks.append(params_flat[idx])                           # Wi^T (H, H)
        blocks.append(jnp.zeros((8, H), jnp.float32).at[0:1, :].set(params_flat[idx + 1]))
        idx += 2
    wl_row = params_flat[idx][:, 0][None, :]                      # (1, H)
    blocks.append(jnp.zeros((8, H), jnp.float32).at[0:1, :].set(wl_row))
    return jnp.concatenate(blocks, axis=0)


# --------------------------------------------------------------------------
# Wrapper around pallas_call
# --------------------------------------------------------------------------
@functools.partial(jax.jit,
                   static_argnames=("n_u", "n_f", "n_hidden", "hidden_w", "nu"))
def pinn_loss(points_slab, param_slab, *, n_u, n_f, n_hidden, hidden_w, nu):
    """Mirrors PhysicsInformedNN.forward == loss(x_u, t_u, u, x_f, t_f)."""
    kernel = make_pinn_loss_kernel(n_u, n_f, n_hidden, hidden_w, float(nu),
                                   1.0 / n_u, 1.0 / n_f)
    out = pl.pallas_call(
        kernel,
        out_shape=jax.ShapeDtypeStruct((8, 128), jnp.float32),
        in_specs=[pl.BlockSpec(memory_space=pltpu.MemorySpace.VMEM)] * 2,
        out_specs=pl.BlockSpec(memory_space=pltpu.MemorySpace.VMEM),
        scratch_shapes=[pltpu.VMEM((n_u + 4 * n_f, hidden_w), jnp.float32)],
    )(points_slab, param_slab)
    return out[0, 0]


# --------------------------------------------------------------------------
# Pure-JAX reference (jax.grad, mirroring torch.autograd.grad)
# --------------------------------------------------------------------------
def _ref_loss(params_flat, x_u, t_u, u, x_f, t_f, n_hidden, nu):
    hidden = [(params_flat[2 * i], params_flat[2 * i + 1]) for i in range(n_hidden)]
    wlt = params_flat[-1]

    def mlp_scalar(x, t):
        z = jnp.stack([x, t])
        for wt, b in hidden:
            z = jnp.tanh(z @ wt + b[0])
        return (z @ wlt)[0]

    u_fn = mlp_scalar
    ux_fn = jax.grad(u_fn, 0)
    ut_fn = jax.grad(u_fn, 1)
    uxx_fn = jax.grad(ux_fn, 0)

    u_pred = jax.vmap(u_fn)(x_u[:, 0], t_u[:, 0])[:, None]
    uu = jax.vmap(u_fn)(x_f[:, 0], t_f[:, 0])
    ux = jax.vmap(ux_fn)(x_f[:, 0], t_f[:, 0])
    ut = jax.vmap(ut_fn)(x_f[:, 0], t_f[:, 0])
    uxx = jax.vmap(uxx_fn)(x_f[:, 0], t_f[:, 0])
    f = ut + uu * ux - nu * uxx
    return jnp.mean((u - u_pred) ** 2) + jnp.mean(f**2)


# --------------------------------------------------------------------------
# Main
# --------------------------------------------------------------------------
if __name__ == "__main__":
    key = jax.random.PRNGKey(0)
    layers = [2, 32, 32, 1]          # PINN layers spec (2 hidden tanh layers)
    n_hidden = len(layers) - 2
    hidden_w = layers[1]
    nu = 0.01
    n_u, n_f = 32, 64                # N_u + 4*N_f = 288 stacked rows

    # Deterministic synthetic parameters, stored transposed (in, out) once at setup.
    params_flat = []
    for i in range(n_hidden):
        key, kw, kb = jax.random.split(key, 3)
        fan_in, fan_out = layers[i], layers[i + 1]
        scale = jnp.sqrt(2.0 / (fan_in + fan_out))
        params_flat.append(jax.random.normal(kw, (fan_in, fan_out), jnp.float32) * scale)
        params_flat.append(jax.random.normal(kb, (1, fan_out), jnp.float32) * 0.1)
    key, kw = jax.random.split(key)
    params_flat.append(
        jax.random.normal(kw, (layers[-2], layers[-1]), jnp.float32)
        * jnp.sqrt(2.0 / (layers[-2] + layers[-1]))
    )

    # Deterministic synthetic training points (Burgers domain x in [-1,1], t in [0,1]).
    key, k1, k2, k3, k4, k5 = jax.random.split(key, 6)
    x_u = jax.random.uniform(k1, (n_u, 1), jnp.float32, -1.0, 1.0)
    t_u = jax.random.uniform(k2, (n_u, 1), jnp.float32, 0.0, 1.0)
    u_tgt = jax.random.normal(k3, (n_u, 1), jnp.float32)
    x_f = jax.random.uniform(k4, (n_f, 1), jnp.float32, -1.0, 1.0)
    t_f = jax.random.uniform(k5, (n_f, 1), jnp.float32, 0.0, 1.0)

    # One-time packing into 2 lane/sublane-aligned DMA slabs.
    points_slab = jax.block_until_ready(pack_points(x_u, t_u, u_tgt, x_f, t_f))
    param_slab = jax.block_until_ready(pack_params(params_flat, layers))

    loss = pinn_loss(points_slab, param_slab,
                     n_u=n_u, n_f=n_f, n_hidden=n_hidden, hidden_w=hidden_w, nu=nu)
    loss = jax.block_until_ready(loss)

    loss_ref = _ref_loss(params_flat, x_u, t_u, u_tgt, x_f, t_f, n_hidden, nu)
    np.testing.assert_allclose(np.asarray(loss), np.asarray(loss_ref),
                               rtol=1e-3, atol=1e-4)

    print("KERNEL_OK")
</pallas_src>

<mosaic_0001>
module attributes {stable_mosaic.version = 11 : i64} {
  func.func @kernel(%arg0: memref<96x128xf32, #tpu.memory_space<vmem>>, %arg1: memref<56x32xf32, #tpu.memory_space<vmem>>, %arg2: memref<8x128xf32, #tpu.memory_space<vmem>>, %arg3: memref<288x32xf32, #tpu.memory_space<vmem>>) attributes {dimension_semantics = [], scalar_prefetch = 0 : i64, scratch_operands = 1 : i64, tpu.core_type = #tpu.core_type<tc>} {
    %c0 = arith.constant 0 : index
    %c0_0 = arith.constant 0 : index
    %0 = vector.load %arg0[%c0, %c0_0] : memref<96x128xf32, #tpu.memory_space<vmem>>, vector<96x128xf32>
    %c0_1 = arith.constant 0 : index
    %c0_2 = arith.constant 0 : index
    %1 = vector.load %arg1[%c0_1, %c0_2] : memref<56x32xf32, #tpu.memory_space<vmem>>, vector<56x32xf32>
    %2 = vector.extract_strided_slice %1 {offsets = [0, 0], sizes = [1, 32], strides = [1, 1]} : vector<56x32xf32> to vector<1x32xf32>
    %3 = vector.extract_strided_slice %1 {offsets = [1, 0], sizes = [1, 32], strides = [1, 1]} : vector<56x32xf32> to vector<1x32xf32>
    %4 = vector.extract_strided_slice %1 {offsets = [2, 0], sizes = [1, 32], strides = [1, 1]} : vector<56x32xf32> to vector<1x32xf32>
    %5 = vector.extract_strided_slice %1 {offsets = [8, 0], sizes = [32, 32], strides = [1, 1]} : vector<56x32xf32> to vector<32x32xf32>
    %6 = vector.extract_strided_slice %1 {offsets = [40, 0], sizes = [1, 32], strides = [1, 1]} : vector<56x32xf32> to vector<1x32xf32>
    %7 = vector.extract_strided_slice %1 {offsets = [48, 0], sizes = [1, 32], strides = [1, 1]} : vector<56x32xf32> to vector<1x32xf32>
    %8 = vector.extract_strided_slice %0 {offsets = [0, 0], sizes = [96, 1], strides = [1, 1]} : vector<96x128xf32> to vector<96x1xf32>
    %9 = vector.extract_strided_slice %0 {offsets = [0, 1], sizes = [96, 1], strides = [1, 1]} : vector<96x128xf32> to vector<96x1xf32>
    %10 = vector.extract_strided_slice %0 {offsets = [0, 2], sizes = [32, 1], strides = [1, 1]} : vector<96x128xf32> to vector<32x1xf32>
    %11 = vector.broadcast %8 : vector<96x1xf32> to vector<96x32xf32>
    %12 = vector.broadcast %2 : vector<1x32xf32> to vector<96x32xf32>
    %13 = arith.mulf %11, %12 : vector<96x32xf32>
    %14 = vector.broadcast %9 : vector<96x1xf32> to vector<96x32xf32>
    %15 = vector.broadcast %3 : vector<1x32xf32> to vector<96x32xf32>
    %16 = arith.mulf %14, %15 : vector<96x32xf32>
    %17 = arith.addf %13, %16 : vector<96x32xf32>
    %18 = vector.broadcast %4 : vector<1x32xf32> to vector<96x32xf32>
    %19 = arith.addf %17, %18 : vector<96x32xf32>
    %20 = math.tanh %19 : vector<96x32xf32>
    %21 = vector.extract_strided_slice %20 {offsets = [32, 0], sizes = [64, 32], strides = [1, 1]} : vector<96x32xf32> to vector<64x32xf32>
    %22 = arith.mulf %21, %21 : vector<64x32xf32>
    %cst = arith.constant 1.000000e+00 : f32
    %23 = vector.broadcast %cst : f32 to vector<64x32xf32>
    %24 = arith.subf %23, %22 : vector<64x32xf32>
    %cst_3 = arith.constant -2.000000e+00 : f32
    %25 = vector.broadcast %cst_3 : f32 to vector<64x32xf32>
    %26 = arith.mulf %25, %21 : vector<64x32xf32>
    %27 = arith.mulf %26, %24 : vector<64x32xf32>
    %c0_4 = arith.constant 0 : index
    %c0_5 = arith.constant 0 : index
    %28 = vector.load %arg3[%c0_4, %c0_5] : memref<288x32xf32, #tpu.memory_space<vmem>>, vector<96x32xf32>
    tpu.vector_store %arg3[%c0_4, %c0_5], %20 {strides = array<i32>} : memref<288x32xf32, #tpu.memory_space<vmem>>, vector<96x32xf32>,
    %29 = vector.broadcast %2 : vector<1x32xf32> to vector<64x32xf32>
    %30 = arith.mulf %24, %29 : vector<64x32xf32>
    %c96 = arith.constant 96 : index
    %c0_6 = arith.constant 0 : index
    %31 = vector.load %arg3[%c96, %c0_6] : memref<288x32xf32, #tpu.memory_space<vmem>>, vector<64x32xf32>
    tpu.vector_store %arg3[%c96, %c0_6], %30 {strides = array<i32>} : memref<288x32xf32, #tpu.memory_space<vmem>>, vector<64x32xf32>,
    %32 = vector.broadcast %3 : vector<1x32xf32> to vector<64x32xf32>
    %33 = arith.mulf %24, %32 : vector<64x32xf32>
    %c160 = arith.constant 160 : index
    %c0_7 = arith.constant 0 : index
    %34 = vector.load %arg3[%c160, %c0_7] : memref<288x32xf32, #tpu.memory_space<vmem>>, vector<64x32xf32>
    tpu.vector_store %arg3[%c160, %c0_7], %33 {strides = array<i32>} : memref<288x32xf32, #tpu.memory_space<vmem>>, vector<64x32xf32>,
    %35 = arith.mulf %2, %2 : vector<1x32xf32>
    %36 = vector.broadcast %35 : vector<1x32xf32> to vector<64x32xf32>
    %37 = arith.mulf %27, %36 : vector<64x32xf32>
    %c224 = arith.constant 224 : index
    %c0_8 = arith.constant 0 : index
    %38 = vector.load %arg3[%c224, %c0_8] : memref<288x32xf32, #tpu.memory_space<vmem>>, vector<64x32xf32>
    tpu.vector_store %arg3[%c224, %c0_8], %37 {strides = array<i32>} : memref<288x32xf32, #tpu.memory_space<vmem>>, vector<64x32xf32>,
    %c0_9 = arith.constant 0 : index
    %c0_10 = arith.constant 0 : index
    %39 = vector.load %arg3[%c0_9, %c0_10] : memref<288x32xf32, #tpu.memory_space<vmem>>, vector<288x32xf32>
    %cst_11 = arith.constant dense<0.000000e+00> : vector<288x32xf32>
    %40 = tpu.matmul %39, %5, %cst_11 {dimension_numbers = #tpu.dot_dimension_numbers<[1], [0], [0], [1], [0, 0, 1, 1], [], []>} : vector<288x32xf32>, vector<32x32xf32>, vector<288x32xf32> -> vector<288x32xf32>
    %41 = vector.extract_strided_slice %40 {offsets = [0, 0], sizes = [96, 32], strides = [1, 1]} : vector<288x32xf32> to vector<96x32xf32>
    %42 = vector.broadcast %6 : vector<1x32xf32> to vector<96x32xf32>
    %43 = arith.addf %41, %42 : vector<96x32xf32>
    %44 = math.tanh %43 : vector<96x32xf32>
    %45 = vector.extract_strided_slice %44 {offsets = [32, 0], sizes = [64, 32], strides = [1, 1]} : vector<96x32xf32> to vector<64x32xf32>
    %46 = arith.mulf %45, %45 : vector<64x32xf32>
    %cst_12 = arith.constant 1.000000e+00 : f32
    %47 = vector.broadcast %cst_12 : f32 to vector<64x32xf32>
    %48 = arith.subf %47, %46 : vector<64x32xf32>
    %cst_13 = arith.constant -2.000000e+00 : f32
    %49 = vector.broadcast %cst_13 : f32 to vector<64x32xf32>
    %50 = arith.mulf %49, %45 : vector<64x32xf32>
    %51 = arith.mulf %50, %48 : vector<64x32xf32>
    %52 = vector.extract_strided_slice %40 {offsets = [96, 0], sizes = [64, 32], strides = [1, 1]} : vector<288x32xf32> to vector<64x32xf32>
    %53 = vector.extract_strided_slice %40 {offsets = [160, 0], sizes = [64, 32], strides = [1, 1]} : vector<288x32xf32> to vector<64x32xf32>
    %54 = vector.extract_strided_slice %40 {offsets = [224, 0], sizes = [64, 32], strides = [1, 1]} : vector<288x32xf32> to vector<64x32xf32>
    %c0_14 = arith.constant 0 : index
    %c0_15 = arith.constant 0 : index
    %55 = vector.load %arg3[%c0_14, %c0_15] : memref<288x32xf32, #tpu.memory_space<vmem>>, vector<96x32xf32>
    tpu.vector_store %arg3[%c0_14, %c0_15], %44 {strides = array<i32>} : memref<288x32xf32, #tpu.memory_space<vmem>>, vector<96x32xf32>,
    %56 = arith.mulf %48, %52 : vector<64x32xf32>
    %c96_16 = arith.constant 96 : index
    %c0_17 = arith.constant 0 : index
    %57 = vector.load %arg3[%c96_16, %c0_17] : memref<288x32xf32, #tpu.memory_space<vmem>>, vector<64x32xf32>
    tpu.vector_store %arg3[%c96_16, %c0_17], %56 {strides = array<i32>} : memref<288x32xf32, #tpu.memory_space<vmem>>, vector<64x32xf32>,
    %58 = arith.mulf %48, %53 : vector<64x32xf32>
    %c160_18 = arith.constant 160 : index
    %c0_19 = arith.constant 0 : index
    %59 = vector.load %arg3[%c160_18, %c0_19] : memref<288x32xf32, #tpu.memory_space<vmem>>, vector<64x32xf32>
    tpu.vector_store %arg3[%c160_18, %c0_19], %58 {strides = array<i32>} : memref<288x32xf32, #tpu.memory_space<vmem>>, vector<64x32xf32>,
    %60 = arith.mulf %51, %52 : vector<64x32xf32>
    %61 = arith.mulf %60, %52 : vector<64x32xf32>
    %62 = arith.mulf %48, %54 : vector<64x32xf32>
    %63 = arith.addf %61, %62 : vector<64x32xf32>
    %c224_20 = arith.constant 224 : index
    %c0_21 = arith.constant 0 : index
    %64 = vector.load %arg3[%c224_20, %c0_21] : memref<288x32xf32, #tpu.memory_space<vmem>>, vector<64x32xf32>
    tpu.vector_store %arg3[%c224_20, %c0_21], %63 {strides = array<i32>} : memref<288x32xf32, #tpu.memory_space<vmem>>, vector<64x32xf32>,
    %c0_22 = arith.constant 0 : index
    %c0_23 = arith.constant 0 : index
    %65 = vector.load %arg3[%c0_22, %c0_23] : memref<288x32xf32, #tpu.memory_space<vmem>>, vector<288x32xf32>
    %66 = vector.broadcast %7 : vector<1x32xf32> to vector<288x32xf32>
    %67 = arith.mulf %65, %66 : vector<288x32xf32>
    %cst_24 = arith.constant dense<0.000000e+00> : vector<288xf32>
    %68 = vector.multi_reduction <add>, %67, %cst_24 [1] : vector<288x32xf32> to vector<288xf32>
    %69 = vector.shape_cast %68 : vector<288xf32> to vector<288x1xf32>
    %70 = vector.extract_strided_slice %69 {offsets = [0, 0], sizes = [32, 1], strides = [1, 1]} : vector<288x1xf32> to vector<32x1xf32>
    %71 = vector.extract_strided_slice %69 {offsets = [32, 0], sizes = [64, 1], strides = [1, 1]} : vector<288x1xf32> to vector<64x1xf32>
    %72 = vector.extract_strided_slice %69 {offsets = [96, 0], sizes = [64, 1], strides = [1, 1]} : vector<288x1xf32> to vector<64x1xf32>
    %73 = vector.extract_strided_slice %69 {offsets = [160, 0], sizes = [64, 1], strides = [1, 1]} : vector<288x1xf32> to vector<64x1xf32>
    %74 = vector.extract_strided_slice %69 {offsets = [224, 0], sizes = [64, 1], strides = [1, 1]} : vector<288x1xf32> to vector<64x1xf32>
    %75 = arith.mulf %71, %72 : vector<64x1xf32>
    %76 = arith.addf %73, %75 : vector<64x1xf32>
    %cst_25 = arith.constant 0.00999999977 : f32
    %77 = vector.broadcast %cst_25 : f32 to vector<64x1xf32>
    %78 = arith.mulf %77, %74 : vector<64x1xf32>
    %79 = arith.subf %76, %78 : vector<64x1xf32>
    %80 = arith.subf %10, %70 : vector<32x1xf32>
    %81 = arith.mulf %80, %80 : vector<32x1xf32>
    %82 = vector.shape_cast %81 : vector<32x1xf32> to vector<1x32x1xf32>
    %cst_26 = arith.constant dense<0.000000e+00> : vector<1xf32>
    %83 = vector.multi_reduction <add>, %82, %cst_26 [1, 2] : vector<1x32x1xf32> to vector<1xf32>
    %84 = vector.shape_cast %83 : vector<1xf32> to vector<1x1x1xf32>
    %85 = vector.extract %84[0, 0, 0] : f32 from vector<1x1x1xf32>
    %86 = vector.broadcast %85 : f32 to vector<1x1xf32>
    %87 = arith.mulf %79, %79 : vector<64x1xf32>
    %88 = vector.shape_cast %87 : vector<64x1xf32> to vector<1x64x1xf32>
    %cst_27 = arith.constant dense<0.000000e+00> : vector<1xf32>
    %89 = vector.multi_reduction <add>, %88, %cst_27 [1, 2] : vector<1x64x1xf32> to vector<1xf32>
    %90 = vector.shape_cast %89 : vector<1xf32> to vector<1x1x1xf32>
    %91 = vector.extract %90[0, 0, 0] : f32 from vector<1x1x1xf32>
    %92 = vector.broadcast %91 : f32 to vector<1x1xf32>
    %cst_28 = arith.constant 3.125000e-02 : f32
    %93 = vector.broadcast %cst_28 : f32 to vector<1x1xf32>
    %94 = arith.mulf %86, %93 : vector<1x1xf32>
    %cst_29 = arith.constant 1.562500e-02 : f32
    %95 = vector.broadcast %cst_29 : f32 to vector<1x1xf32>
    %96 = arith.mulf %92, %95 : vector<1x1xf32>
    %97 = arith.addf %94, %96 : vector<1x1xf32>
    %98 = vector.shape_cast %97 : vector<1x1xf32> to vector<1x1xf32>
    %99 = vector.broadcast %98 : vector<1x1xf32> to vector<8x128xf32>
    %c0_30 = arith.constant 0 : index
    %c0_31 = arith.constant 0 : index
    %100 = vector.load %arg2[%c0_30, %c0_31] : memref<8x128xf32, #tpu.memory_space<vmem>>, vector<8x128xf32>
    tpu.vector_store %arg2[%c0_30, %c0_31], %99 {strides = array<i32>} : memref<8x128xf32, #tpu.memory_space<vmem>>, vector<8x128xf32>,
    return
  }
}

</mosaic_0001>

<llo_original>
// kernel: pinn_loss.1
$region0: #{pinn_loss.1}
  #allocation0 [shape = 'u32[]', space=smem, size = 0x4, offset = 0x4, fixed_abs, tag = 'smem constant byte address 0x4 - core index']
  #allocation1 [shape = 'u32[72,128]{1,0:T(1,128)}', space=vmem, size = 0x9000, scoped, tag = 'internal scratch']
  #allocation2 [shape = 'f32[288,32]{1,0:T(8,128)}', space=vmem, size = 0x24000, scoped, tag = 'scratch operand']
  %s0 = inlined_call_operand.hbm [shape: f32[96,128], index: 0, kind: input, shape index: {}]
  %s1 = inlined_call_operand.vmem [shape: f32[56,32], index: 1, kind: input, shape index: {}]
  %s2 = inlined_call_operand.vmem [shape: f32[8,128], index: 2, kind: output, shape index: {}]
  %s3 = sld [smem:[#allocation0]]
  $region22: #{pinn_loss.1} parent=0
    _
  %s5 = ssub.s32 1, %s3
  %s6 = scalar_select 0, %s5, %s3
  $region1: #{pinn_loss.1} parent=0
    #allocation3 [shape = 'u8[49152]{0}', space=vmem, size = 0xc000, scoped, tag = 'input window, operand 0, single buffered']
    #allocation4 [shape = 's32[1]{0}', space=sflag, size = 0x4, scoped, tag = 'scoped memory for pinn_loss.1']
    %7 = vsyncpa [#allocation4], 0
    // Predicated region
    $region2: #{pinn_loss.1} parent=1 // pred_check
      _
    $region3: #{pinn_loss.1} parent=1 // pred_check_branch
      %9 = sbr.rel (0) target = $region5
    $region4: #{pinn_loss.1} parent=1 // pred_region
      %11 = vsyncadd [#allocation4], 0
      %s12 = sshll.u32 %s0, 4
      %s13 = int_to_ptr.hbm [resolvable:$true] %s12
      %s14 = sshll.u32 [#allocation3], 4
      %s15 = int_to_ptr.vmem [resolvable:$true] %s14
      %20 = dma.hbm_to_vmem [thread:$0]  %s13, 1536, %s15, [#allocation4], 128, 128, 8
    $region5: #{pinn_loss.1} parent=1 // pred_fallthru
      _
    // Predicated region
    $region6: #{pinn_loss.1} parent=1 // pred_check
      _
    $region7: #{pinn_loss.1} parent=1 // pred_check_branch
      %22 = sbr.rel (0) target = $region9
    $region8: #{pinn_loss.1} parent=1 // pred_region
      _
    $region9: #{pinn_loss.1} parent=1 // pred_fallthru
      _
    // Predicated region
    $region10: #{pinn_loss.1} parent=1 // pred_check
      _
    $region11: #{pinn_loss.1} parent=1 // pred_check_branch
      %24 = sbr.rel (0) target = $region13
    $region12: #{pinn_loss.1} parent=1 // pred_region
      %26 = dma.done [#allocation4], 1536
    $region13: #{pinn_loss.1} parent=1 // pred_fallthru
      _
    %v27 = vld [vmem:[#allocation3] sm:$0xff]
    %v28 = vld [vmem:[#allocation3 + $0x8] sm:$0xff]
    %v29 = vld [vmem:[#allocation3 + $0x10] sm:$0xff]
    %v30 = vld [vmem:[#allocation3 + $0x18] sm:$0xff]
    %v31 = vld [vmem:[#allocation3 + $0x20] sm:$0xff]
    %v32 = vld [vmem:[#allocation3 + $0x28] sm:$0xff]
    %v33 = vld [vmem:[#allocation3 + $0x30] sm:$0xff]
    %v34 = vld [vmem:[#allocation3 + $0x38] sm:$0xff]
    %v35 = vld [vmem:[#allocation3 + $0x40] sm:$0xff]
    %v36 = vld [vmem:[#allocation3 + $0x48] sm:$0xff]
    %v37 = vld [vmem:[#allocation3 + $0x50] sm:$0xff]
    %v38 = vld [vmem:[#allocation3 + $0x58] sm:$0xff]
    %v39 = vld [vmem:[%s1] sm:$0xff]
    %v40 = vld [vmem:[%s1 + $0x8] sm:$0xff]
    %v41 = vld [vmem:[%s1 + $0x10] sm:$0xff]
    %v42 = vld [vmem:[%s1 + $0x18] sm:$0xff]
    %v43 = vld [vmem:[%s1 + $0x20] sm:$0xff]
    %v44 = vld [vmem:[%s1 + $0x28] sm:$0xff]
    %v45 = vld [vmem:[%s1 + $0x30] sm:$0xff]
    %47 = vset.pattern.permute.xlu0 0
    %48 = vperm.xlu0 %47, %v27
    %v49 = vpop.permute.xlu0 %48
    %52 = vset.pattern.permute.xlu0 0
    %53 = vperm.xlu0 %52, %v28
    %v54 = vpop.permute.xlu0 %53
    %57 = vset.pattern.permute.xlu0 0
    %58 = vperm.xlu0 %57, %v29
    %v59 = vpop.permute.xlu0 %58
    %62 = vset.pattern.permute.xlu0 0
    %63 = vperm.xlu0 %62, %v30
    %v64 = vpop.permute.xlu0 %63
    %67 = vset.pattern.permute.xlu0 0
    %68 = vperm.xlu0 %67, %v31
    %v69 = vpop.permute.xlu0 %68
    %72 = vset.pattern.permute.xlu0 0
    %73 = vperm.xlu0 %72, %v32
    %v74 = vpop.permute.xlu0 %73
    %77 = vset.pattern.permute.xlu0 0
    %78 = vperm.xlu0 %77, %v33
    %v79 = vpop.permute.xlu0 %78
    %82 = vset.pattern.permute.xlu0 0
    %83 = vperm.xlu0 %82, %v34
    %v84 = vpop.permute.xlu0 %83
    %87 = vset.pattern.permute.xlu0 0
    %88 = vperm.xlu0 %87, %v35
    %v89 = vpop.permute.xlu0 %88
    %92 = vset.pattern.permute.xlu0 0
    %93 = vperm.xlu0 %92, %v36
    %v94 = vpop.permute.xlu0 %93
    %97 = vset.pattern.permute.xlu0 0
    %98 = vperm.xlu0 %97, %v37
    %v99 = vpop.permute.xlu0 %98
    %102 = vset.pattern.permute.xlu0 0
    %103 = vperm.xlu0 %102, %v38
    %v104 = vpop.permute.xlu0 %103
    %v106 = vperm.slane %v39, 0
    %v107 = vmul.f32 %v49, %v106
    %v108 = vmul.f32 %v54, %v106
    %v109 = vmul.f32 %v59, %v106
    %v110 = vmul.f32 %v64, %v106
    %v111 = vmul.f32 %v69, %v106
    %v112 = vmul.f32 %v74, %v106
    %v113 = vmul.f32 %v79, %v106
    %v114 = vmul.f32 %v84, %v106
    %v115 = vmul.f32 %v89, %v106
    %v116 = vmul.f32 %v94, %v106
    %v117 = vmul.f32 %v99, %v106
    %v118 = vmul.f32 %v104, %v106
    %119 = vset.pattern.permute.xlu0 1
    %120 = vperm.xlu0 %119, %v27
    %v121 = vpop.permute.xlu0 %120
    %123 = vset.pattern.permute.xlu0 1
    %124 = vperm.xlu0 %123, %v28
    %v125 = vpop.permute.xlu0 %124
    %127 = vset.pattern.permute.xlu0 1
    %128 = vperm.xlu0 %127, %v29
    %v129 = vpop.permute.xlu0 %128
    %131 = vset.pattern.permute.xlu0 1
    %132 = vperm.xlu0 %131, %v30
    %v133 = vpop.permute.xlu0 %132
    %135 = vset.pattern.permute.xlu0 1
    %136 = vperm.xlu0 %135, %v31
    %v137 = vpop.permute.xlu0 %136
    %139 = vset.pattern.permute.xlu0 1
    %140 = vperm.xlu0 %139, %v32
    %v141 = vpop.permute.xlu0 %140
    %143 = vset.pattern.permute.xlu0 1
    %144 = vperm.xlu0 %143, %v33
    %v145 = vpop.permute.xlu0 %144
    %147 = vset.pattern.permute.xlu0 1
    %148 = vperm.xlu0 %147, %v34
    %v149 = vpop.permute.xlu0 %148
    %151 = vset.pattern.permute.xlu0 1
    %152 = vperm.xlu0 %151, %v35
    %v153 = vpop.permute.xlu0 %152
    %155 = vset.pattern.permute.xlu0 1
    %156 = vperm.xlu0 %155, %v36
    %v157 = vpop.permute.xlu0 %156
    %159 = vset.pattern.permute.xlu0 1
    %160 = vperm.xlu0 %159, %v37
    %v161 = vpop.permute.xlu0 %160
    %163 = vset.pattern.permute.xlu0 1
    %164 = vperm.xlu0 %163, %v38
    %v165 = vpop.permute.xlu0 %164
    %v167 = vperm.slane %v39, 1
    %v168 = vmul.f32 %v121, %v167
    %v169 = vmul.f32 %v125, %v167
    %v170 = vmul.f32 %v129, %v167
    %v171 = vmul.f32 %v133, %v167
    %v172 = vmul.f32 %v137, %v167
    %v173 = vmul.f32 %v141, %v167
    %v174 = vmul.f32 %v145, %v167
    %v175 = vmul.f32 %v149, %v167
    %v176 = vmul.f32 %v153, %v167
    %v177 = vmul.f32 %v157, %v167
    %v178 = vmul.f32 %v161, %v167
    %v179 = vmul.f32 %v165, %v167
    %v180 = vadd.f32 %v107, %v168
    %v181 = vadd.f32 %v108, %v169
    %v182 = vadd.f32 %v109, %v170
    %v183 = vadd.f32 %v110, %v171
    %v184 = vadd.f32 %v111, %v172
    %v185 = vadd.f32 %v112, %v173
    %v186 = vadd.f32 %v113, %v174
    %v187 = vadd.f32 %v114, %v175
    %v188 = vadd.f32 %v115, %v176
    %v189 = vadd.f32 %v116, %v177
    %v190 = vadd.f32 %v117, %v178
    %v191 = vadd.f32 %v118, %v179
    %v192 = vperm.slane %v39, 2
    %v193 = vadd.f32 %v180, %v192
    %v194 = vadd.f32 %v181, %v192
    %v195 = vadd.f32 %v182, %v192
    %v196 = vadd.f32 %v183, %v192
    %v197 = vadd.f32 %v184, %v192
    %v198 = vadd.f32 %v185, %v192
    %v199 = vadd.f32 %v186, %v192
    %v200 = vadd.f32 %v187, %v192
    %v201 = vadd.f32 %v188, %v192
    %v202 = vadd.f32 %v189, %v192
    %v203 = vadd.f32 %v190, %v192
    %v204 = vadd.f32 %v191, %v192
    %v205 = vtanh.pop %v193
    %v206 = vtanh.pop %v194
    %v207 = vtanh.pop %v195
    %v208 = vtanh.pop %v196
    %v209 = vtanh.pop %v197
    %v210 = vtanh.pop %v198
    %v211 = vtanh.pop %v199
    %v212 = vtanh.pop %v200
    %v213 = vtanh.pop %v201
    %v214 = vtanh.pop %v202
    %v215 = vtanh.pop %v203
    %v216 = vtanh.pop %v204
    %v217 = vmul.f32 %v209, %v209
    %v218 = vmul.f32 %v210, %v210
    %v219 = vmul.f32 %v211, %v211
    %v220 = vmul.f32 %v212, %v212
    %v221 = vmul.f32 %v213, %v213
    %v222 = vmul.f32 %v214, %v214
    %v223 = vmul.f32 %v215, %v215
    %v224 = vmul.f32 %v216, %v216
    %v225 = vsub.f32 1.0, %v217
    %v226 = vsub.f32 1.0, %v218
    %v227 = vsub.f32 1.0, %v219
    %v228 = vsub.f32 1.0, %v220
    %v229 = vsub.f32 1.0, %v221
    %v230 = vsub.f32 1.0, %v222
    %v231 = vsub.f32 1.0, %v223
    %v232 = vsub.f32 1.0, %v224
    %v233 = vmul.f32 %v209, -2.0
    %v234 = vmul.f32 %v210, -2.0
    %v235 = vmul.f32 %v211, -2.0
    %v236 = vmul.f32 %v212, -2.0
    %v237 = vmul.f32 %v213, -2.0
    %v238 = vmul.f32 %v214, -2.0
    %v239 = vmul.f32 %v215, -2.0
    %v240 = vmul.f32 %v216, -2.0
    %v241 = vmul.f32 %v233, %v225
    %v242 = vmul.f32 %v234, %v226
    %v243 = vmul.f32 %v235, %v227
    %v244 = vmul.f32 %v236, %v228
    %v245 = vmul.f32 %v237, %v229
    %v246 = vmul.f32 %v238, %v230
    %v247 = vmul.f32 %v239, %v231
    %v248 = vmul.f32 %v240, %v232
    %vm249 = vcmask 261120
    %250 = vst.msk [vmem:[#allocation2] sm:$0xff] %vm249, %v205
    %251 = vst.msk [vmem:[#allocation2 + $0x8] sm:$0xff] %vm249, %v206
    %252 = vst.msk [vmem:[#allocation2 + $0x10] sm:$0xff] %vm249, %v207
    %253 = vst.msk [vmem:[#allocation2 + $0x18] sm:$0xff] %vm249, %v208
    %254 = vst.msk [vmem:[#allocation2 + $0x20] sm:$0xff] %vm249, %v209
    %255 = vst.msk [vmem:[#allocation2 + $0x28] sm:$0xff] %vm249, %v210
    %256 = vst.msk [vmem:[#allocation2 + $0x30] sm:$0xff] %vm249, %v211
    %257 = vst.msk [vmem:[#allocation2 + $0x38] sm:$0xff] %vm249, %v212
    %258 = vst.msk [vmem:[#allocation2 + $0x40] sm:$0xff] %vm249, %v213
    %259 = vst.msk [vmem:[#allocation2 + $0x48] sm:$0xff] %vm249, %v214
    %260 = vst.msk [vmem:[#allocation2 + $0x50] sm:$0xff] %vm249, %v215
    %261 = vst.msk [vmem:[#allocation2 + $0x58] sm:$0xff] %vm249, %v216
    %v262 = vmul.f32 %v225, %v106
    %v263 = vmul.f32 %v226, %v106
    %v264 = vmul.f32 %v227, %v106
    %v265 = vmul.f32 %v228, %v106
    %v266 = vmul.f32 %v229, %v106
    %v267 = vmul.f32 %v230, %v106
    %v268 = vmul.f32 %v231, %v106
    %v269 = vmul.f32 %v232, %v106
    %270 = vst.msk [vmem:[#allocation2 + $0x60] sm:$0xff] %vm249, %v262
    %271 = vst.msk [vmem:[#allocation2 + $0x68] sm:$0xff] %vm249, %v263
    %272 = vst.msk [vmem:[#allocation2 + $0x70] sm:$0xff] %vm249, %v264
    %273 = vst.msk [vmem:[#allocation2 + $0x78] sm:$0xff] %vm249, %v265
    %274 = vst.msk [vmem:[#allocation2 + $0x80] sm:$0xff] %vm249, %v266
    %275 = vst.msk [vmem:[#allocation2 + $0x88] sm:$0xff] %vm249, %v267
    %276 = vst.msk [vmem:[#allocation2 + $0x90] sm:$0xff] %vm249, %v268
    %277 = vst.msk [vmem:[#allocation2 + $0x98] sm:$0xff] %vm249, %v269
    %v278 = vmul.f32 %v225, %v167
    %v279 = vmul.f32 %v226, %v167
    %v280 = vmul.f32 %v227, %v167
    %v281 = vmul.f32 %v228, %v167
    %v282 = vmul.f32 %v229, %v167
    %v283 = vmul.f32 %v230, %v167
    %v284 = vmul.f32 %v231, %v167
    %v285 = vmul.f32 %v232, %v167
    %286 = vst.msk [vmem:[#allocation2 + $0xa0] sm:$0xff] %vm249, %v278
    %287 = vst.msk [vmem:[#allocation2 + $0xa8] sm:$0xff] %vm249, %v279
    %288 = vst.msk [vmem:[#allocation2 + $0xb0] sm:$0xff] %vm249, %v280
    %289 = vst.msk [vmem:[#allocation2 + $0xb8] sm:$0xff] %vm249, %v281
    %290 = vst.msk [vmem:[#allocation2 + $0xc0] sm:$0xff] %vm249, %v282
    %291 = vst.msk [vmem:[#allocation2 + $0xc8] sm:$0xff] %vm249, %v283
    %292 = vst.msk [vmem:[#allocation2 + $0xd0] sm:$0xff] %vm249, %v284
    %293 = vst.msk [vmem:[#allocation2 + $0xd8] sm:$0xff] %vm249, %v285
    %v294 = vmul.f32 %v39, %v39
    %v295 = vperm.slane %v294, 0
    %v296 = vmul.f32 %v241, %v295
    %v297 = vmul.f32 %v242, %v295
    %v298 = vmul.f32 %v243, %v295
    %v299 = vmul.f32 %v244, %v295
    %v300 = vmul.f32 %v245, %v295
    %v301 = vmul.f32 %v246, %v295
    %v302 = vmul.f32 %v247, %v295
    %v303 = vmul.f32 %v248, %v295
    %304 = vst.msk [vmem:[#allocation2 + $0xe0] sm:$0xff] %vm249, %v296
    %305 = vst.msk [vmem:[#allocation2 + $0xe8] sm:$0xff] %vm249, %v297
    %306 = vst.msk [vmem:[#allocation2 + $0xf0] sm:$0xff] %vm249, %v298
    %307 = vst.msk [vmem:[#allocation2 + $0xf8] sm:$0xff] %vm249, %v299
    %308 = vst.msk [vmem:[#allocation2 + $0x100] sm:$0xff] %vm249, %v300
    %309 = vst.msk [vmem:[#allocation2 + $0x108] sm:$0xff] %vm249, %v301
    %310 = vst.msk [vmem:[#allocation2 + $0x110] sm:$0xff] %vm249, %v302
    %311 = vst.msk [vmem:[#allocation2 + $0x118] sm:$0xff] %vm249, %v303
    %v312 = vld [vmem:[#allocation2] sm:$0xff]
    %v313 = vld [vmem:[#allocation2 + $0x8] sm:$0xff]
    %v314 = vld [vmem:[#allocation2 + $0x10] sm:$0xff]
    %v315 = vld [vmem:[#allocation2 + $0x18] sm:$0xff]
    %v316 = vld [vmem:[#allocation2 + $0x20] sm:$0xff]
    %v317 = vld [vmem:[#allocation2 + $0x28] sm:$0xff]
    %v318 = vld [vmem:[#allocation2 + $0x30] sm:$0xff]
    %v319 = vld [vmem:[#allocation2 + $0x38] sm:$0xff]
    %v320 = vld [vmem:[#allocation2 + $0x40] sm:$0xff]
    %v321 = vld [vmem:[#allocation2 + $0x48] sm:$0xff]
    %v322 = vld [vmem:[#allocation2 + $0x50] sm:$0xff]
    %v323 = vld [vmem:[#allocation2 + $0x58] sm:$0xff]
    %v324 = vld [vmem:[#allocation2 + $0x60] sm:$0xff]
    %v325 = vld [vmem:[#allocation2 + $0x68] sm:$0xff]
    %v326 = vld [vmem:[#allocation2 + $0x70] sm:$0xff]
    %v327 = vld [vmem:[#allocation2 + $0x78] sm:$0xff]
    %v328 = vld [vmem:[#allocation2 + $0x80] sm:$0xff]
    %v329 = vld [vmem:[#allocation2 + $0x88] sm:$0xff]
    %v330 = vld [vmem:[#allocation2 + $0x90] sm:$0xff]
    %v331 = vld [vmem:[#allocation2 + $0x98] sm:$0xff]
    %v332 = vld [vmem:[#allocation2 + $0xa0] sm:$0xff]
    %v333 = vld [vmem:[#allocation2 + $0xa8] sm:$0xff]
    %v334 = vld [vmem:[#allocation2 + $0xb0] sm:$0xff]
    %v335 = vld [vmem:[#allocation2 + $0xb8] sm:$0xff]
    %v336 = vld [vmem:[#allocation2 + $0xc0] sm:$0xff]
    %v337 = vld [vmem:[#allocation2 + $0xc8] sm:$0xff]
    %v338 = vld [vmem:[#allocation2 + $0xd0] sm:$0xff]
    %v339 = vld [vmem:[#allocation2 + $0xd8] sm:$0xff]
    %v340 = vld [vmem:[#allocation2 + $0xe0] sm:$0xff]
    %v341 = vld [vmem:[#allocation2 + $0xe8] sm:$0xff]
    %v342 = vld [vmem:[#allocation2 + $0xf0] sm:$0xff]
    %v343 = vld [vmem:[#allocation2 + $0xf8] sm:$0xff]
    %v344 = vld [vmem:[#allocation2 + $0x100] sm:$0xff]
    %v345 = vld [vmem:[#allocation2 + $0x108] sm:$0xff]
    %v346 = vld [vmem:[#allocation2 + $0x110] sm:$0xff]
    %v347 = vld [vmem:[#allocation2 + $0x118] sm:$0xff]
    %v349 = vsel %vm249, %v312, 0
    %v352 = vsel %vm249, %v313, 0
    %v355 = vsel %vm249, %v314, 0
    %v358 = vsel %vm249, %v315, 0
    %v361 = vsel %vm249, %v316, 0
    %v364 = vsel %vm249, %v317, 0
    %v367 = vsel %vm249, %v318, 0
    %v370 = vsel %vm249, %v319, 0
    %v373 = vsel %vm249, %v320, 0
    %v376 = vsel %vm249, %v321, 0
    %v379 = vsel %vm249, %v322, 0
    %v382 = vsel %vm249, %v323, 0
    %v385 = vsel %vm249, %v324, 0
    %v388 = vsel %vm249, %v325, 0
    %v391 = vsel %vm249, %v326, 0
    %v394 = vsel %vm249, %v327, 0
    %v397 = vsel %vm249, %v328, 0
    %v400 = vsel %vm249, %v329, 0
    %v403 = vsel %vm249, %v330, 0
    %v406 = vsel %vm249, %v331, 0
    %v409 = vsel %vm249, %v332, 0
    %v412 = vsel %vm249, %v333, 0
    %v415 = vsel %vm249, %v334, 0
    %v418 = vsel %vm249, %v335, 0
    %v421 = vsel %vm249, %v336, 0
    %v424 = vsel %vm249, %v337, 0
    %v427 = vsel %vm249, %v338, 0
    %v430 = vsel %vm249, %v339, 0
    %v433 = vsel %vm249, %v340, 0
    %v436 = vsel %vm249, %v341, 0
    %v439 = vsel %vm249, %v342, 0
    %v442 = vsel %vm249, %v343, 0
    %v445 = vsel %vm249, %v344, 0
    %v448 = vsel %vm249, %v345, 0
    %v451 = vsel %vm249, %v346, 0
    %v454 = vsel %vm249, %v347, 0
    %456 = vmatpush.msra.mxu0 0.0
    %457 = vmatpush.msra.mxu0 0.0
    %458 = vmatpush.msra.mxu0 0.0
    %459 = vmatpush.msra.mxu0 0.0
    %460 = vmatpush.msra.mxu0 0.0
    %461 = vmatpush.msra.mxu0 0.0
    %462 = vmatpush.msra.mxu0 0.0
    %463 = vmatpush.msra.mxu0 0.0
    %464 = vmatpush.msra.mxu0 0.0
    %465 = vmatpush.msra.mxu0 0.0
    %466 = vmatpush.msra.mxu0 0.0
    %467 = vmatpush.msra.mxu0 0.0
    %468 = vmatpush.msra.mxu0 %v43
    %469 = vmatpush.msra.mxu0 %v42
    %470 = vmatpush.msra.mxu0 %v41
    %471 = vmatpush.msra.mxu0 %v40
    %472 = vmatmul.f32.gmra.mxu0 %v349
    %v473 = vpop.f32.mrf.mxu0
    %v474 = vadd.f32 0.0, %v473
    %475 = vmatmul.f32.gmra.mxu0 %v352
    %v476 = vpop.f32.mrf.mxu0
    %v477 = vadd.f32 0.0, %v476
    %478 = vmatmul.f32.gmra.mxu0 %v355
    %v479 = vpop.f32.mrf.mxu0
    %v480 = vadd.f32 0.0, %v479
    %481 = vmatmul.f32.gmra.mxu0 %v358
    %v482 = vpop.f32.mrf.mxu0
    %v483 = vadd.f32 0.0, %v482
    %484 = vmatmul.f32.gmra.mxu0 %v361
    %v485 = vpop.f32.mrf.mxu0
    %v486 = vadd.f32 0.0, %v485
    %487 = vmatmul.f32.gmra.mxu0 %v364
    %v488 = vpop.f32.mrf.mxu0
    %v489 = vadd.f32 0.0, %v488
    %490 = vmatmul.f32.gmra.mxu0 %v367
    %v491 = vpop.f32.mrf.mxu0
    %v492 = vadd.f32 0.0, %v491
    %493 = vmatmul.f32.gmra.mxu0 %v370
    %v494 = vpop.f32.mrf.mxu0
    %v495 = vadd.f32 0.0, %v494
    %496 = vmatmul.f32.gmra.mxu0 %v373
    %v497 = vpop.f32.mrf.mxu0
    %v498 = vadd.f32 0.0, %v497
    %499 = vmatmul.f32.gmra.mxu0 %v376
    %v500 = vpop.f32.mrf.mxu0
    %v501 = vadd.f32 0.0, %v500
    %502 = vmatmul.f32.gmra.mxu0 %v379
    %v503 = vpop.f32.mrf.mxu0
    %v504 = vadd.f32 0.0, %v503
    %505 = vmatmul.f32.gmra.mxu0 %v382
    %v506 = vpop.f32.mrf.mxu0
    %v507 = vadd.f32 0.0, %v506
    %508 = vmatmul.f32.gmra.mxu0 %v385
    %v509 = vpop.f32.mrf.mxu0
    %v510 = vadd.f32 0.0, %v509
    %511 = vmatmul.f32.gmra.mxu0 %v388
    %v512 = vpop.f32.mrf.mxu0
    %v513 = vadd.f32 0.0, %v512
    %514 = vmatmul.f32.gmra.mxu0 %v391
    %v515 = vpop.f32.mrf.mxu0
    %v516 = vadd.f32 0.0, %v515
    %517 = vmatmul.f32.gmra.mxu0 %v394
    %v518 = vpop.f32.mrf.mxu0
    %v519 = vadd.f32 0.0, %v518
    %520 = vmatmul.f32.gmra.mxu0 %v397
    %v521 = vpop.f32.mrf.mxu0
    %v522 = vadd.f32 0.0, %v521
    %523 = vmatmul.f32.gmra.mxu0 %v400
    %v524 = vpop.f32.mrf.mxu0
    %v525 = vadd.f32 0.0, %v524
    %526 = vmatmul.f32.gmra.mxu0 %v403
    %v527 = vpop.f32.mrf.mxu0
    %v528 = vadd.f32 0.0, %v527
    %529 = vmatmul.f32.gmra.mxu0 %v406
    %v530 = vpop.f32.mrf.mxu0
    %v531 = vadd.f32 0.0, %v530
    %532 = vmatmul.f32.gmra.mxu0 %v409
    %v533 = vpop.f32.mrf.mxu0
    %v534 = vadd.f32 0.0, %v533
    %535 = vmatmul.f32.gmra.mxu0 %v412
    %v536 = vpop.f32.mrf.mxu0
    %v537 = vadd.f32 0.0, %v536
    %538 = vmatmul.f32.gmra.mxu0 %v415
    %v539 = vpop.f32.mrf.mxu0
    %v540 = vadd.f32 0.0, %v539
    %541 = vmatmul.f32.gmra.mxu0 %v418
    %v542 = vpop.f32.mrf.mxu0
    %v543 = vadd.f32 0.0, %v542
    %544 = vmatmul.f32.gmra.mxu0 %v421
    %v545 = vpop.f32.mrf.mxu0
    %v546 = vadd.f32 0.0, %v545
    %547 = vmatmul.f32.gmra.mxu0 %v424
    %v548 = vpop.f32.mrf.mxu0
    %v549 = vadd.f32 0.0, %v548
    %550 = vmatmul.f32.gmra.mxu0 %v427
    %v551 = vpop.f32.mrf.mxu0
    %v552 = vadd.f32 0.0, %v551
    %553 = vmatmul.f32.gmra.mxu0 %v430
    %v554 = vpop.f32.mrf.mxu0
    %v555 = vadd.f32 0.0, %v554
    %556 = vmatmul.f32.gmra.mxu0 %v433
    %v557 = vpop.f32.mrf.mxu0
    %v558 = vadd.f32 0.0, %v557
    %559 = vmatmul.f32.gmra.mxu0 %v436
    %v560 = vpop.f32.mrf.mxu0
    %v561 = vadd.f32 0.0, %v560
    %562 = vmatmul.f32.gmra.mxu0 %v439
    %v563 = vpop.f32.mrf.mxu0
    %v564 = vadd.f32 0.0, %v563
    %565 = vmatmul.f32.gmra.mxu0 %v442
    %v566 = vpop.f32.mrf.mxu0
    %v567 = vadd.f32 0.0, %v566
    %568 = vmatmul.f32.gmra.mxu0 %v445
    %v569 = vpop.f32.mrf.mxu0
    %v570 = vadd.f32 0.0, %v569
    %571 = vmatmul.f32.gmra.mxu0 %v448
    %v572 = vpop.f32.mrf.mxu0
    %v573 = vadd.f32 0.0, %v572
    %574 = vmatmul.f32.gmra.mxu0 %v451
    %v575 = vpop.f32.mrf.mxu0
    %v576 = vadd.f32 0.0, %v575
    %577 = vmatmul.f32.gmra.mxu0 %v454
    %v578 = vpop.f32.mrf.mxu0
    %v579 = vadd.f32 0.0, %v578
    %580 = vdwg.mxu0
    %v581 = vperm.slane %v44, 0
    %v582 = vadd.f32 %v474, %v581
    %v583 = vadd.f32 %v477, %v581
    %v584 = vadd.f32 %v480, %v581
    %v585 = vadd.f32 %v483, %v581
    %v586 = vadd.f32 %v486, %v581
    %v587 = vadd.f32 %v489, %v581
    %v588 = vadd.f32 %v492, %v581
    %v589 = vadd.f32 %v495, %v581
    %v590 = vadd.f32 %v498, %v581
    %v591 = vadd.f32 %v501, %v581
    %v592 = vadd.f32 %v504, %v581
    %v593 = vadd.f32 %v507, %v581
    %v594 = vtanh.pop %v582
    %v595 = vtanh.pop %v583
    %v596 = vtanh.pop %v584
    %v597 = vtanh.pop %v585
    %v598 = vtanh.pop %v586
    %v599 = vtanh.pop %v587
    %v600 = vtanh.pop %v588
    %v601 = vtanh.pop %v589
    %v602 = vtanh.pop %v590
    %v603 = vtanh.pop %v591
    %v604 = vtanh.pop %v592
    %v605 = vtanh.pop %v593
    %v606 = vmul.f32 %v598, %v598
    %v607 = vmul.f32 %v599, %v599
    %v608 = vmul.f32 %v600, %v600
    %v609 = vmul.f32 %v601, %v601
    %v610 = vmul.f32 %v602, %v602
    %v611 = vmul.f32 %v603, %v603
    %v612 = vmul.f32 %v604, %v604
    %v613 = vmul.f32 %v605, %v605
    %v614 = vsub.f32 1.0, %v606
    %v615 = vsub.f32 1.0, %v607
    %v616 = vsub.f32 1.0, %v608
    %v617 = vsub.f32 1.0, %v609
    %v618 = vsub.f32 1.0, %v610
    %v619 = vsub.f32 1.0, %v611
    %v620 = vsub.f32 1.0, %v612
    %v621 = vsub.f32 1.0, %v613
    %v622 = vmul.f32 %v598, -2.0
    %v623 = vmul.f32 %v599, -2.0
    %v624 = vmul.f32 %v600, -2.0
    %v625 = vmul.f32 %v601, -2.0
    %v626 = vmul.f32 %v602, -2.0
    %v627 = vmul.f32 %v603, -2.0
    %v628 = vmul.f32 %v604, -2.0
    %v629 = vmul.f32 %v605, -2.0
    %v630 = vmul.f32 %v622, %v614
    %v631 = vmul.f32 %v623, %v615
    %v632 = vmul.f32 %v624, %v616
    %v633 = vmul.f32 %v625, %v617
    %v634 = vmul.f32 %v626, %v618
    %v635 = vmul.f32 %v627, %v619
    %v636 = vmul.f32 %v628, %v620
    %v637 = vmul.f32 %v629, %v621
    %638 = vst.msk [vmem:[#allocation2] sm:$0xff] %vm249, %v594
    %639 = vst.msk [vmem:[#allocation2 + $0x8] sm:$0xff] %vm249, %v595
    %640 = vst.msk [vmem:[#allocation2 + $0x10] sm:$0xff] %vm249, %v596
    %641 = vst.msk [vmem:[#allocation2 + $0x18] sm:$0xff] %vm249, %v597
    %642 = vst.msk [vmem:[#allocation2 + $0x20] sm:$0xff] %vm249, %v598
    %643 = vst.msk [vmem:[#allocation2 + $0x28] sm:$0xff] %vm249, %v599
    %644 = vst.msk [vmem:[#allocation2 + $0x30] sm:$0xff] %vm249, %v600
    %645 = vst.msk [vmem:[#allocation2 + $0x38] sm:$0xff] %vm249, %v601
    %646 = vst.msk [vmem:[#allocation2 + $0x40] sm:$0xff] %vm249, %v602
    %647 = vst.msk [vmem:[#allocation2 + $0x48] sm:$0xff] %vm249, %v603
    %648 = vst.msk [vmem:[#allocation2 + $0x50] sm:$0xff] %vm249, %v604
    %649 = vst.msk [vmem:[#allocation2 + $0x58] sm:$0xff] %vm249, %v605
    %v650 = vmul.f32 %v614, %v510
    %v651 = vmul.f32 %v615, %v513
    %v652 = vmul.f32 %v616, %v516
    %v653 = vmul.f32 %v617, %v519
    %v654 = vmul.f32 %v618, %v522
    %v655 = vmul.f32 %v619, %v525
    %v656 = vmul.f32 %v620, %v528
    %v657 = vmul.f32 %v621, %v531
    %658 = vst.msk [vmem:[#allocation2 + $0x60] sm:$0xff] %vm249, %v650
    %659 = vst.msk [vmem:[#allocation2 + $0x68] sm:$0xff] %vm249, %v651
    %660 = vst.msk [vmem:[#allocation2 + $0x70] sm:$0xff] %vm249, %v652
    %661 = vst.msk [vmem:[#allocation2 + $0x78] sm:$0xff] %vm249, %v653
    %662 = vst.msk [vmem:[#allocation2 + $0x80] sm:$0xff] %vm249, %v654
    %663 = vst.msk [vmem:[#allocation2 + $0x88] sm:$0xff] %vm249, %v655
    %664 = vst.msk [vmem:[#allocation2 + $0x90] sm:$0xff] %vm249, %v656
    %665 = vst.msk [vmem:[#allocation2 + $0x98] sm:$0xff] %vm249, %v657
    %v666 = vmul.f32 %v614, %v534
    %v667 = vmul.f32 %v615, %v537
    %v668 = vmul.f32 %v616, %v540
    %v669 = vmul.f32 %v617, %v543
    %v670 = vmul.f32 %v618, %v546
    %v671 = vmul.f32 %v619, %v549
    %v672 = vmul.f32 %v620, %v552
    %v673 = vmul.f32 %v621, %v555
    %674 = vst.msk [vmem:[#allocation2 + $0xa0] sm:$0xff] %vm249, %v666
    %675 = vst.msk [vmem:[#allocation2 + $0xa8] sm:$0xff] %vm249, %v667
    %676 = vst.msk [vmem:[#allocation2 + $0xb0] sm:$0xff] %vm249, %v668
    %677 = vst.msk [vmem:[#allocation2 + $0xb8] sm:$0xff] %vm249, %v669
    %678 = vst.msk [vmem:[#allocation2 + $0xc0] sm:$0xff] %vm249, %v670
    %679 = vst.msk [vmem:[#allocation2 + $0xc8] sm:$0xff] %vm249, %v671
    %680 = vst.msk [vmem:[#allocation2 + $0xd0] sm:$0xff] %vm249, %v672
    %681 = vst.msk [vmem:[#allocation2 + $0xd8] sm:$0xff] %vm249, %v673
    %v682 = vmul.f32 %v630, %v510
    %v683 = vmul.f32 %v631, %v513
    %v684 = vmul.f32 %v632, %v516
    %v685 = vmul.f32 %v633, %v519
    %v686 = vmul.f32 %v634, %v522
    %v687 = vmul.f32 %v635, %v525
    %v688 = vmul.f32 %v636, %v528
    %v689 = vmul.f32 %v637, %v531
    %v690 = vmul.f32 %v682, %v510
    %v691 = vmul.f32 %v683, %v513
    %v692 = vmul.f32 %v684, %v516
    %v693 = vmul.f32 %v685, %v519
    %v694 = vmul.f32 %v686, %v522
    %v695 = vmul.f32 %v687, %v525
    %v696 = vmul.f32 %v688, %v528
    %v697 = vmul.f32 %v689, %v531
    %v698 = vmul.f32 %v614, %v558
    %v699 = vmul.f32 %v615, %v561
    %v700 = vmul.f32 %v616, %v564
    %v701 = vmul.f32 %v617, %v567
    %v702 = vmul.f32 %v618, %v570
    %v703 = vmul.f32 %v619, %v573
    %v704 = vmul.f32 %v620, %v576
    %v705 = vmul.f32 %v621, %v579
    %v706 = vadd.f32 %v690, %v698
    %v707 = vadd.f32 %v691, %v699
    %v708 = vadd.f32 %v692, %v700
    %v709 = vadd.f32 %v693, %v701
    %v710 = vadd.f32 %v694, %v702
    %v711 = vadd.f32 %v695, %v703
    %v712 = vadd.f32 %v696, %v704
    %v713 = vadd.f32 %v697, %v705
    %714 = vst.msk [vmem:[#allocation2 + $0xe0] sm:$0xff] %vm249, %v706
    %715 = vst.msk [vmem:[#allocation2 + $0xe8] sm:$0xff] %vm249, %v707
    %716 = vst.msk [vmem:[#allocation2 + $0xf0] sm:$0xff] %vm249, %v708
    %717 = vst.msk [vmem:[#allocation2 + $0xf8] sm:$0xff] %vm249, %v709
    %718 = vst.msk [vmem:[#allocation2 + $0x100] sm:$0xff] %vm249, %v710
    %719 = vst.msk [vmem:[#allocation2 + $0x108] sm:$0xff] %vm249, %v711
    %720 = vst.msk [vmem:[#allocation2 + $0x110] sm:$0xff] %vm249, %v712
    %721 = vst.msk [vmem:[#allocation2 + $0x118] sm:$0xff] %vm249, %v713
    %v722 = vld [vmem:[#allocation2] sm:$0xff]
    %v723 = vld [vmem:[#allocation2 + $0x8] sm:$0xff]
    %v724 = vld [vmem:[#allocation2 + $0x10] sm:$0xff]
    %v725 = vld [vmem:[#allocation2 + $0x18] sm:$0xff]
    %v726 = vld [vmem:[#allocation2 + $0x20] sm:$0xff]
    %v727 = vld [vmem:[#allocation2 + $0x28] sm:$0xff]
    %v728 = vld [vmem:[#allocation2 + $0x30] sm:$0xff]
    %v729 = vld [vmem:[#allocation2 + $0x38] sm:$0xff]
    %v730 = vld [vmem:[#allocation2 + $0x40] sm:$0xff]
    %v731 = vld [vmem:[#allocation2 + $0x48] sm:$0xff]
    %v732 = vld [vmem:[#allocation2 + $0x50] sm:$0xff]
    %v733 = vld [vmem:[#allocation2 + $0x58] sm:$0xff]
    %v734 = vld [vmem:[#allocation2 + $0x60] sm:$0xff]
    %v735 = vld [vmem:[#allocation2 + $0x68] sm:$0xff]
    %v736 = vld [vmem:[#allocation2 + $0x70] sm:$0xff]
    %v737 = vld [vmem:[#allocation2 + $0x78] sm:$0xff]
    %v738 = vld [vmem:[#allocation2 + $0x80] sm:$0xff]
    %v739 = vld [vmem:[#allocation2 + $0x88] sm:$0xff]
    %v740 = vld [vmem:[#allocation2 + $0x90] sm:$0xff]
    %v741 = vld [vmem:[#allocation2 + $0x98] sm:$0xff]
    %v742 = vld [vmem:[#allocation2 + $0xa0] sm:$0xff]
    %v743 = vld [vmem:[#allocation2 + $0xa8] sm:$0xff]
    %v744 = vld [vmem:[#allocation2 + $0xb0] sm:$0xff]
    %v745 = vld [vmem:[#allocation2 + $0xb8] sm:$0xff]
    %v746 = vld [vmem:[#allocation2 + $0xc0] sm:$0xff]
    %v747 = vld [vmem:[#allocation2 + $0xc8] sm:$0xff]
    %v748 = vld [vmem:[#allocation2 + $0xd0] sm:$0xff]
    %v749 = vld [vmem:[#allocation2 + $0xd8] sm:$0xff]
    %v750 = vld [vmem:[#allocation2 + $0xe0] sm:$0xff]
    %v751 = vld [vmem:[#allocation2 + $0xe8] sm:$0xff]
    %v752 = vld [vmem:[#allocation2 + $0xf0] sm:$0xff]
    %v753 = vld [vmem:[#allocation2 + $0xf8] sm:$0xff]
    %v754 = vld [vmem:[#allocation2 + $0x100] sm:$0xff]
    %v755 = vld [vmem:[#allocation2 + $0x108] sm:$0xff]
    %v756 = vld [vmem:[#allocation2 + $0x110] sm:$0xff]
    %v757 = vld [vmem:[#allocation2 + $0x118] sm:$0xff]
    %v758 = vperm.slane %v45, 0
    %v759 = vmul.f32 %v722, %v758
    %v760 = vmul.f32 %v723, %v758
    %v761 = vmul.f32 %v724, %v758
    %v762 = vmul.f32 %v725, %v758
    %v763 = vmul.f32 %v726, %v758
    %v764 = vmul.f32 %v727, %v758
    %v765 = vmul.f32 %v728, %v758
    %v766 = vmul.f32 %v729, %v758
    %v767 = vmul.f32 %v730, %v758
    %v768 = vmul.f32 %v731, %v758
    %v769 = vmul.f32 %v732, %v758
    %v770 = vmul.f32 %v733, %v758
    %v771 = vmul.f32 %v734, %v758
    %v772 = vmul.f32 %v735, %v758
    %v773 = vmul.f32 %v736, %v758
    %v774 = vmul.f32 %v737, %v758
    %v775 = vmul.f32 %v738, %v758
    %v776 = vmul.f32 %v739, %v758
    %v777 = vmul.f32 %v740, %v758
    %v778 = vmul.f32 %v741, %v758
    %v779 = vmul.f32 %v742, %v758
    %v780 = vmul.f32 %v743, %v758
    %v781 = vmul.f32 %v744, %v758
    %v782 = vmul.f32 %v745, %v758
    %v783 = vmul.f32 %v746, %v758
    %v784 = vmul.f32 %v747, %v758
    %v785 = vmul.f32 %v748, %v758
    %v786 = vmul.f32 %v749, %v758
    %v787 = vmul.f32 %v750, %v758
    %v788 = vmul.f32 %v751, %v758
    %v789 = vmul.f32 %v752, %v758
    %v790 = vmul.f32 %v753, %v758
    %v791 = vmul.f32 %v754, %v758
    %v792 = vmul.f32 %v755, %v758
    %v793 = vmul.f32 %v756, %v758
    %v794 = vmul.f32 %v757, %v758
    %v795 = vsel %vm249, %v759, 0.0
    %796 = vadd.xlane.f32.xlu0 %v795
    %v797 = vpop.xlane.xlu0 %796
    %v798 = vsel %vm249, %v760, 0.0
    %799 = vadd.xlane.f32.xlu0 %v798
    %v800 = vpop.xlane.xlu0 %799
    %v801 = vsel %vm249, %v761, 0.0
    %802 = vadd.xlane.f32.xlu0 %v801
    %v803 = vpop.xlane.xlu0 %802
    %v804 = vsel %vm249, %v762, 0.0
    %805 = vadd.xlane.f32.xlu0 %v804
    %v806 = vpop.xlane.xlu0 %805
    %v807 = vsel %vm249, %v763, 0.0
    %808 = vadd.xlane.f32.xlu0 %v807
    %v809 = vpop.xlane.xlu0 %808
    %v810 = vsel %vm249, %v764, 0.0
    %811 = vadd.xlane.f32.xlu0 %v810
    %v812 = vpop.xlane.xlu0 %811
    %v813 = vsel %vm249, %v765, 0.0
    %814 = vadd.xlane.f32.xlu0 %v813
    %v815 = vpop.xlane.xlu0 %814
    %v816 = vsel %vm249, %v766, 0.0
    %817 = vadd.xlane.f32.xlu0 %v816
    %v818 = vpop.xlane.xlu0 %817
    %v819 = vsel %vm249, %v767, 0.0
    %820 = vadd.xlane.f32.xlu0 %v819
    %v821 = vpop.xlane.xlu0 %820
    %v822 = vsel %vm249, %v768, 0.0
    %823 = vadd.xlane.f32.xlu0 %v822
    %v824 = vpop.xlane.xlu0 %823
    %v825 = vsel %vm249, %v769, 0.0
    %826 = vadd.xlane.f32.xlu0 %v825
    %v827 = vpop.xlane.xlu0 %826
    %v828 = vsel %vm249, %v770, 0.0
    %829 = vadd.xlane.f32.xlu0 %v828
    %v830 = vpop.xlane.xlu0 %829
    %v831 = vsel %vm249, %v771, 0.0
    %832 = vadd.xlane.f32.xlu0 %v831
    %v833 = vpop.xlane.xlu0 %832
    %v834 = vsel %vm249, %v772, 0.0
    %835 = vadd.xlane.f32.xlu0 %v834
    %v836 = vpop.xlane.xlu0 %835
    %v837 = vsel %vm249, %v773, 0.0
    %838 = vadd.xlane.f32.xlu0 %v837
    %v839 = vpop.xlane.xlu0 %838
    %v840 = vsel %vm249, %v774, 0.0
    %841 = vadd.xlane.f32.xlu0 %v840
    %v842 = vpop.xlane.xlu0 %841
    %v843 = vsel %vm249, %v775, 0.0
    %844 = vadd.xlane.f32.xlu0 %v843
    %v845 = vpop.xlane.xlu0 %844
    %v846 = vsel %vm249, %v776, 0.0
    %847 = vadd.xlane.f32.xlu0 %v846
    %v848 = vpop.xlane.xlu0 %847
    %v849 = vsel %vm249, %v777, 0.0
    %850 = vadd.xlane.f32.xlu0 %v849
    %v851 = vpop.xlane.xlu0 %850
    %v852 = vsel %vm249, %v778, 0.0
    %853 = vadd.xlane.f32.xlu0 %v852
    %v854 = vpop.xlane.xlu0 %853
    %v855 = vsel %vm249, %v779, 0.0
    %856 = vadd.xlane.f32.xlu0 %v855
    %v857 = vpop.xlane.xlu0 %856
    %v858 = vsel %vm249, %v780, 0.0
    %859 = vadd.xlane.f32.xlu0 %v858
    %v860 = vpop.xlane.xlu0 %859
    %v861 = vsel %vm249, %v781, 0.0
    %862 = vadd.xlane.f32.xlu0 %v861
    %v863 = vpop.xlane.xlu0 %862
    %v864 = vsel %vm249, %v782, 0.0
    %865 = vadd.xlane.f32.xlu0 %v864
    %v866 = vpop.xlane.xlu0 %865
    %v867 = vsel %vm249, %v783, 0.0
    %868 = vadd.xlane.f32.xlu0 %v867
    %v869 = vpop.xlane.xlu0 %868
    %v870 = vsel %vm249, %v784, 0.0
    %871 = vadd.xlane.f32.xlu0 %v870
    %v872 = vpop.xlane.xlu0 %871
    %v873 = vsel %vm249, %v785, 0.0
    %874 = vadd.xlane.f32.xlu0 %v873
    %v875 = vpop.xlane.xlu0 %874
    %v876 = vsel %vm249, %v786, 0.0
    %877 = vadd.xlane.f32.xlu0 %v876
    %v878 = vpop.xlane.xlu0 %877
    %v879 = vsel %vm249, %v787, 0.0
    %880 = vadd.xlane.f32.xlu0 %v879
    %v881 = vpop.xlane.xlu0 %880
    %v882 = vsel %vm249, %v788, 0.0
    %883 = vadd.xlane.f32.xlu0 %v882
    %v884 = vpop.xlane.xlu0 %883
    %v885 = vsel %vm249, %v789, 0.0
    %886 = vadd.xlane.f32.xlu0 %v885
    %v887 = vpop.xlane.xlu0 %886
    %v888 = vsel %vm249, %v790, 0.0
    %889 = vadd.xlane.f32.xlu0 %v888
    %v890 = vpop.xlane.xlu0 %889
    %v891 = vsel %vm249, %v791, 0.0
    %892 = vadd.xlane.f32.xlu0 %v891
    %v893 = vpop.xlane.xlu0 %892
    %v894 = vsel %vm249, %v792, 0.0
    %895 = vadd.xlane.f32.xlu0 %v894
    %v896 = vpop.xlane.xlu0 %895
    %v897 = vsel %vm249, %v793, 0.0
    %898 = vadd.xlane.f32.xlu0 %v897
    %v899 = vpop.xlane.xlu0 %898
    %v900 = vsel %vm249, %v794, 0.0
    %901 = vadd.xlane.f32.xlu0 %v900
    %v902 = vpop.xlane.xlu0 %901
    %v903 = vmul.f32 %v809, %v833
    %v904 = vmul.f32 %v812, %v836
    %v905 = vmul.f32 %v815, %v839
    %v906 = vmul.f32 %v818, %v842
    %v907 = vmul.f32 %v821, %v845
    %v908 = vmul.f32 %v824, %v848
    %v909 = vmul.f32 %v827, %v851
    %v910 = vmul.f32 %v830, %v854
    %v911 = vadd.f32 %v857, %v903
    %v912 = vadd.f32 %v860, %v904
    %v913 = vadd.f32 %v863, %v905
    %v914 = vadd.f32 %v866, %v906
    %v915 = vadd.f32 %v869, %v907
    %v916 = vadd.f32 %v872, %v908
    %v917 = vadd.f32 %v875, %v909
    %v918 = vadd.f32 %v878, %v910
    %v919 = vmul.f32 %v881, 0.01
    %v920 = vmul.f32 %v884, 0.01
    %v921 = vmul.f32 %v887, 0.01
    %v922 = vmul.f32 %v890, 0.01
    %v923 = vmul.f32 %v893, 0.01
    %v924 = vmul.f32 %v896, 0.01
    %v925 = vmul.f32 %v899, 0.01
    %v926 = vmul.f32 %v902, 0.01
    %v927 = vsub.f32 %v911, %v919
    %v928 = vsub.f32 %v912, %v920
    %v929 = vsub.f32 %v913, %v921
    %v930 = vsub.f32 %v914, %v922
    %v931 = vsub.f32 %v915, %v923
    %v932 = vsub.f32 %v916, %v924
    %v933 = vsub.f32 %v917, %v925
    %v934 = vsub.f32 %v918, %v926
    %v935 = vsub.f32 %v27, %v797
    %v936 = vsub.f32 %v28, %v800
    %v937 = vsub.f32 %v29, %v803
    %v938 = vsub.f32 %v30, %v806
    %v939 = vmul.f32 %v935, %v935
    %v940 = vmul.f32 %v936, %v936
    %v941 = vmul.f32 %v937, %v937
    %v942 = vmul.f32 %v938, %v938
    %947 = vrot.lane.b32.xlu0 %v939, 126
    %v948 = vpop.permute.xlu0 %947
    %949 = vrot.lane.b32.xlu0 %v940, 126
    %v950 = vpop.permute.xlu0 %949
    %951 = vrot.lane.b32.xlu0 %v941, 126
    %v952 = vpop.permute.xlu0 %951
    %953 = vrot.lane.b32.xlu0 %v942, 126
    %v954 = vpop.permute.xlu0 %953
    %vm959 = vcmask 7168
    %v960 = vsel %vm959, %v948, 0.0
    %v961 = vsel %vm959, %v950, 0.0
    %v962 = vadd.f32 %v960, %v961
    %v963 = vsel %vm959, %v952, 0.0
    %v964 = vadd.f32 %v962, %v963
    %v965 = vsel %vm959, %v954, 0.0
    %v966 = vadd.f32 %v964, %v965
    %967 = vadd.xlane.f32.xlu0 %v966
    %v968 = vpop.xlane.xlu0 %967
    %v969 = vrot.slane %v968, 4
    %v970 = vadd.f32 %v968, %v969
    %v971 = vrot.slane %v970, 2
    %v972 = vadd.f32 %v970, %v971
    %v973 = vrot.slane %v972, 1
    %v974 = vadd.f32 %v972, %v973
    %s975 = vtos %v974
    %v976 = vstv %s975
    %v977 = vmul.f32 %v927, %v927
    %v978 = vmul.f32 %v928, %v928
    %v979 = vmul.f32 %v929, %v929
    %v980 = vmul.f32 %v930, %v930
    %v981 = vmul.f32 %v931, %v931
    %v982 = vmul.f32 %v932, %v932
    %v983 = vmul.f32 %v933, %v933
    %v984 = vmul.f32 %v934, %v934
    %v985 = vsel %vm959, %v977, 0.0
    %v986 = vsel %vm959, %v978, 0.0
    %v987 = vadd.f32 %v985, %v986
    %v988 = vsel %vm959, %v979, 0.0
    %v989 = vadd.f32 %v987, %v988
    %v990 = vsel %vm959, %v980, 0.0
    %v991 = vadd.f32 %v989, %v990
    %v992 = vsel %vm959, %v981, 0.0
    %v993 = vadd.f32 %v991, %v992
    %v994 = vsel %vm959, %v982, 0.0
    %v995 = vadd.f32 %v993, %v994
    %v996 = vsel %vm959, %v983, 0.0
    %v997 = vadd.f32 %v995, %v996
    %v998 = vsel %vm959, %v984, 0.0
    %v999 = vadd.f32 %v997, %v998
    %1000 = vadd.xlane.f32.xlu0 %v999
    %v1001 = vpop.xlane.xlu0 %1000
    %v1002 = vrot.slane %v1001, 4
    %v1003 = vadd.f32 %v1001, %v1002
    %v1004 = vrot.slane %v1003, 2
    %v1005 = vadd.f32 %v1003, %v1004
    %v1006 = vrot.slane %v1005, 1
    %v1007 = vadd.f32 %v1005, %v1006
    %s1008 = vtos %v1007
    %v1009 = vstv %s1008
    %v1010 = vmul.f32 %v976, 0.03125
    %v1011 = vmul.f32 %v1009, 0.015625
    %v1012 = vadd.f32 %v1010, %v1011
    %1013 = vst [vmem:[%s2] sm:$0xff] %v1012
    // Predicated region
    $region14: #{pinn_loss.1} parent=1 // pred_check
      _
    $region15: #{pinn_loss.1} parent=1 // pred_check_branch
      %1015 = sbr.rel (0) target = $region17
    $region16: #{pinn_loss.1} parent=1 // pred_region
      _
    $region17: #{pinn_loss.1} parent=1 // pred_fallthru
      _
    // Predicated region
    $region18: #{pinn_loss.1} parent=1 // pred_check
      _
    $region19: #{pinn_loss.1} parent=1 // pred_check_branch
      %1017 = sbr.rel (0) target = $region21
    $region20: #{pinn_loss.1} parent=1 // pred_region
      _
    $region21: #{pinn_loss.1} parent=1 // pred_fallthru
      _
    %1018 = vsyncpa [#allocation4], 1

</llo_original>
